<compile_context>
chip_gen: v6e
topology: v6e:2x2x1
jax: 0.10.0
libtpu: 0.0.40
codegen_flags: <defaults>
</compile_context>

<pallas_src>
import functools

import jax
import jax.numpy as jnp
from jax.experimental import pallas as pl
from jax.experimental.pallas import tpu as pltpu


def _tv_kernel(wts_ref, x_ref, out_ref, acc_ref, *, col_shift, row_shift,
               inv_batch):
    j = pl.program_id(1)

    # Zero the persistent accumulator at the start of each outer chunk.
    @pl.when(j == 0)
    def _init():
        acc_ref[...] = jnp.zeros_like(acc_ref)

    # (T, hw_pad) tile of flattened (lane-padded) planes, computed in f32.
    x = x_ref[...].astype(jnp.float32)

    # Neighbor values along the flattened pixel axis (per plane-row), via the
    # XLU rotate (positive shifts; pltpu.roll matches jnp.roll semantics):
    #   col_shift = hw_pad - 1 -> brings pixel (h, w+1) to position (h, w)
    #   row_shift = hw_pad - W -> brings pixel (h+1, w) to position (h, w)
    # Wrapped / pad-lane positions are zeroed by the weight rows.
    x_w = pltpu.roll(x, shift=col_shift, axis=1)
    x_h = pltpu.roll(x, shift=row_shift, axis=1)
    dw = x_w - x
    dh = x_h - x

    # wts: (2, hw_pad) f32; row 0 = w_mask / count_w, row 1 = h_mask / count_h.
    wts = wts_ref[...]
    acc_ref[...] += dh * dh * wts[1:2, :] + dw * dw * wts[0:1, :]

    # Last inner step: one deferred cross-lane reduction to this chunk's
    # partial sum, written broadcast over a lane-dense (1, 8, 128) tile.
    @pl.when(j == pl.num_programs(1) - 1)
    def _finalize():
        s = jnp.sum(acc_ref[...]) * inv_batch
        out_ref[...] = jnp.broadcast_to(s, out_ref.shape).astype(jnp.float32)


def _vmem_budget_bytes():
    """Physical-VMEM-aware scoped budget (v5e/v6e: 128 MiB, v7x: 64 MiB/TC)."""
    phys = 64 * 1024 * 1024  # conservative default = v7x per-TensorCore VMEM
    try:
        phys = int(pltpu.get_tpu_info().vmem_capacity_bytes)
    except Exception:
        pass
    # Leave headroom for compiler-internal scratch; cap v5e/v6e at 96 MiB.
    return max(16 * 1024 * 1024, min(phys * 3 // 4, 96 * 1024 * 1024))


def illumination_loss(x, *, target_block_bytes=8 << 20):
    assert x.ndim == 4, f"Expect x to be a 4d tensor but got {x.ndim}d"
    B, C, H, W = x.shape
    P = B * C
    HW = H * W
    count_h = (H - 1) * W
    count_w = H * (W - 1)

    itemsize = x.dtype.itemsize
    # Lane-aligned flattened-pixel length (explicit zero padding below).
    hw_pad = ((HW + 127) // 128) * 128
    # Sublane granularity for the input dtype (f32: 8, bf16: 16, 8-bit: 32).
    sub = {1: 32, 2: 16}.get(itemsize, 8)

    # ---- Tile sizing ------------------------------------------------------
    vmem_limit = _vmem_budget_bytes()
    # Per-plane resident VMEM estimate: 2x double-buffered input tile + f32
    # accumulator + ~5 f32 whole-block temporaries (cast / rolls / diffs).
    per_plane_bytes = hw_pad * (2 * itemsize + 4 + 5 * 4)
    t_cap = max(sub, ((vmem_limit - (2 << 20)) // per_plane_bytes // sub) * sub)
    # Target ~target_block_bytes of input data per grid step (amortizes the
    # ~0.35 us per-step overhead of this HBM-bound kernel).
    t_target = max(sub, (target_block_bytes // (hw_pad * itemsize) // sub) * sub)
    T = min(t_cap, t_target)
    p_pad_sub = ((P + sub - 1) // sub) * sub
    if T >= p_pad_sub:
        T = p_pad_sub  # everything fits in one block
    # TODO(synk): planes whose footprint alone blows the VMEM budget (e.g.
    # full-res 4K/8K f32 images on v7x) need an H-tiled variant with a 1-row
    # halo and per-strip partial sums; this version keeps whole planes per
    # block.

    n_blocks = -(-P // T)
    n_outer = 2 if n_blocks >= 2 else 1   # v7x: 2 TCs; harmless on 1-TC chips
    n_blocks = -(-n_blocks // n_outer) * n_outer
    n_inner = n_blocks // n_outer
    P_pad = n_blocks * T

    # ---- Host-side layout: (B,C,H,W) -> (P_pad, hw_pad), zero padded -------
    x2 = x.reshape(P, HW)
    if P_pad > P or hw_pad > HW:
        # Zero rows / columns contribute exactly 0 through the zero weights.
        x2 = jnp.pad(x2, ((0, P_pad - P), (0, hw_pad - HW)))

    # ---- Per-position weights, resident in VMEM for the whole grid ---------
    #   row 0: 1/count_w where the (h,w)-(h,w+1) pair is valid, else 0
    #   row 1: 1/count_h where the (h,w)-(h+1,w) pair is valid, else 0
    # (Degenerate H == 1 or W == 1 yields 0*inf = NaN, matching PyTorch's 0/0.)
    pos = jnp.arange(hw_pad, dtype=jnp.int32)
    valid = pos < HW
    w_ok = (valid & ((pos % W) != (W - 1))).astype(jnp.float32)
    h_ok = (pos < (H - 1) * W).astype(jnp.float32)
    inv_cw = jnp.float32(1.0) / jnp.float32(count_w)
    inv_ch = jnp.float32(1.0) / jnp.float32(count_h)
    wts = jnp.stack([w_ok * inv_cw, h_ok * inv_ch], axis=0)  # (2, hw_pad) f32

    kernel = functools.partial(
        _tv_kernel,
        col_shift=hw_pad - 1,
        row_shift=hw_pad - W,
        inv_batch=1.0 / float(B),
    )

    cost = pl.CostEstimate(
        flops=9 * P_pad * hw_pad,
        transcendentals=0,
        bytes_accessed=P_pad * hw_pad * itemsize + 2 * hw_pad * 4
        + n_outer * 8 * 128 * 4,
    )

    out = pl.pallas_call(
        kernel,
        out_shape=jax.ShapeDtypeStruct((n_outer, 8, 128), jnp.float32),
        grid_spec=pltpu.PrefetchScalarGridSpec(
            num_scalar_prefetch=0,
            grid=(n_outer, n_inner),
            in_specs=[
                pl.BlockSpec((2, hw_pad), lambda i, j: (0, 0)),    # weights
                pl.BlockSpec((T, hw_pad),
                             lambda i, j: (i * n_inner + j, 0)),   # plane tiles
            ],
            out_specs=pl.BlockSpec((1, 8, 128), lambda i, j: (i, 0, 0)),
            scratch_shapes=[
                pltpu.VMEM((T, hw_pad), jnp.float32),   # elementwise accumulator
            ],
        ),
        compiler_params=pltpu.CompilerParams(
            dimension_semantics=("parallel", "arbitrary"),
            vmem_limit_bytes=vmem_limit,
        ),
        cost_estimate=cost,
    )(wts, x2)
    # Each outer chunk wrote its (already 1/B-scaled) partial broadcast over a
    # lane-dense tile; take one element per chunk and sum.
    return jnp.sum(out[:, 0, 0])


def illumination_loss_ref(x):
    B, C, H, W = x.shape
    count_h = (H - 1) * W
    count_w = H * (W - 1)
    h_tv = jnp.sum(jnp.square(x[:, :, 1:, :] - x[:, :, : H - 1, :]))
    w_tv = jnp.sum(jnp.square(x[:, :, :, 1:] - x[:, :, :, : W - 1]))
    return (h_tv / count_h + w_tv / count_w) / B


if __name__ == "__main__":
    key = jax.random.PRNGKey(0)
    B, C, H, W = 2, 4, 16, 16
    x = jax.random.normal(key, (B, C, H, W), dtype=jnp.float32)

    loss = jax.block_until_ready(illumination_loss(x))
    ref = illumination_loss_ref(x)
    assert jnp.allclose(loss, ref, rtol=1e-5, atol=1e-5), (loss, ref)

    # Also exercise the multi-block path: dual-chunk "parallel" outer axis,
    # multi-step inner accumulation, plane padding, and non-128-aligned H*W
    # (forces column padding + masked rotates).
    x2 = jax.random.normal(jax.random.PRNGKey(1), (2, 20, 7, 9),
                           dtype=jnp.float32)
    loss2 = jax.block_until_ready(
        illumination_loss(x2, target_block_bytes=4096))
    ref2 = illumination_loss_ref(x2)
    assert jnp.allclose(loss2, ref2, rtol=1e-5, atol=1e-5), (loss2, ref2)

    print("KERNEL_OK")
</pallas_src>

<mosaic_0001>
module attributes {stable_mosaic.version = 11 : i64} {
  func.func @_tv_kernel(%arg0: i32, %arg1: i32, %arg2: memref<2x256xf32, #tpu.memory_space<vmem>>, %arg3: memref<8x256xf32, #tpu.memory_space<vmem>>, %arg4: memref<1x8x128xf32, #tpu.memory_space<vmem>>, %arg5: memref<8x256xf32, #tpu.memory_space<vmem>>) attributes {dimension_semantics = [#tpu.dimension_semantics<parallel>, #tpu.dimension_semantics<arbitrary>], iteration_bounds = array<i64: 1, 1>, scalar_prefetch = 0 : i64, scratch_operands = 1 : i64, tpu.core_type = #tpu.core_type<tc>, window_params = [{pipeline_mode = #tpu.pipeline_mode<synchronous>, transform_indices = @transform_0, window_bounds = array<i64: 2, 256>}, {transform_indices = @transform_1, window_bounds = array<i64: 8, 256>}, {transform_indices = @transform_2, window_bounds = array<i64: 1, 8, 128>}]} {
    %c0_i32 = arith.constant 0 : i32
    %0 = arith.cmpi eq, %arg1, %c0_i32 : i32
    %1 = arith.extui %0 : i1 to i32
    %c0_i32_0 = arith.constant 0 : i32
    %2 = arith.cmpi ne, %1, %c0_i32_0 : i32
    scf.if %2 {
      %cst = arith.constant 0.000000e+00 : f32
      %24 = vector.broadcast %cst : f32 to vector<8x256xf32>
      %c0_10 = arith.constant 0 : index
      %c0_11 = arith.constant 0 : index
      %25 = vector.load %arg5[%c0_10, %c0_11] : memref<8x256xf32, #tpu.memory_space<vmem>>, vector<8x256xf32>
      tpu.vector_store %arg5[%c0_10, %c0_11], %24 {strides = array<i32>} : memref<8x256xf32, #tpu.memory_space<vmem>>, vector<8x256xf32>,
    } else {
    }
    %c0 = arith.constant 0 : index
    %c0_1 = arith.constant 0 : index
    %3 = vector.load %arg3[%c0, %c0_1] : memref<8x256xf32, #tpu.memory_space<vmem>>, vector<8x256xf32>
    %c255_i32 = arith.constant 255 : i32
    %4 = tpu.dynamic_rotate %3 by %c255_i32 dim 1 : vector<8x256xf32>, i32 -> vector<8x256xf32>
    %c240_i32 = arith.constant 240 : i32
    %5 = tpu.dynamic_rotate %3 by %c240_i32 dim 1 : vector<8x256xf32>, i32 -> vector<8x256xf32>
    %6 = arith.subf %4, %3 : vector<8x256xf32>
    %7 = arith.subf %5, %3 : vector<8x256xf32>
    %c0_2 = arith.constant 0 : index
    %c0_3 = arith.constant 0 : index
    %8 = vector.load %arg2[%c0_2, %c0_3] : memref<2x256xf32, #tpu.memory_space<vmem>>, vector<2x256xf32>
    %c0_4 = arith.constant 0 : index
    %c0_5 = arith.constant 0 : index
    %9 = vector.load %arg5[%c0_4, %c0_5] : memref<8x256xf32, #tpu.memory_space<vmem>>, vector<8x256xf32>
    %10 = arith.mulf %7, %7 : vector<8x256xf32>
    %11 = vector.extract_strided_slice %8 {offsets = [1, 0], sizes = [1, 256], strides = [1, 1]} : vector<2x256xf32> to vector<1x256xf32>
    %12 = vector.broadcast %11 : vector<1x256xf32> to vector<8x256xf32>
    %13 = arith.mulf %10, %12 : vector<8x256xf32>
    %14 = arith.mulf %6, %6 : vector<8x256xf32>
    %15 = vector.extract_strided_slice %8 {offsets = [0, 0], sizes = [1, 256], strides = [1, 1]} : vector<2x256xf32> to vector<1x256xf32>
    %16 = vector.broadcast %15 : vector<1x256xf32> to vector<8x256xf32>
    %17 = arith.mulf %14, %16 : vector<8x256xf32>
    %18 = arith.addf %13, %17 : vector<8x256xf32>
    %19 = arith.addf %9, %18 : vector<8x256xf32>
    %c0_6 = arith.constant 0 : index
    %c0_7 = arith.constant 0 : index
    %20 = vector.load %arg5[%c0_6, %c0_7] : memref<8x256xf32, #tpu.memory_space<vmem>>, vector<8x256xf32>
    tpu.vector_store %arg5[%c0_6, %c0_7], %19 {strides = array<i32>} : memref<8x256xf32, #tpu.memory_space<vmem>>, vector<8x256xf32>,
    %c0_i32_8 = arith.constant 0 : i32
    %21 = arith.cmpi eq, %arg1, %c0_i32_8 : i32
    %22 = arith.extui %21 : i1 to i32
    %c0_i32_9 = arith.constant 0 : i32
    %23 = arith.cmpi ne, %22, %c0_i32_9 : i32
    scf.if %23 {
      %c0_10 = arith.constant 0 : index
      %c0_11 = arith.constant 0 : index
      %24 = vector.load %arg5[%c0_10, %c0_11] : memref<8x256xf32, #tpu.memory_space<vmem>>, vector<8x256xf32>
      %25 = vector.shape_cast %24 : vector<8x256xf32> to vector<1x8x256xf32>
      %cst = arith.constant dense<0.000000e+00> : vector<1xf32>
      %26 = vector.multi_reduction <add>, %25, %cst [1, 2] : vector<1x8x256xf32> to vector<1xf32>
      %27 = vector.shape_cast %26 : vector<1xf32> to vector<1x1x1xf32>
      %28 = vector.extract %27[0, 0, 0] : f32 from vector<1x1x1xf32>
      %cst_12 = arith.constant 5.000000e-01 : f32
      %29 = arith.mulf %28, %cst_12 : f32
      %30 = vector.broadcast %29 : f32 to vector<1x8x128xf32>
      %c0_13 = arith.constant 0 : index
      %c0_14 = arith.constant 0 : index
      %c0_15 = arith.constant 0 : index
      %31 = vector.load %arg4[%c0_13, %c0_14, %c0_15] : memref<1x8x128xf32, #tpu.memory_space<vmem>>, vector<1x8x128xf32>
      tpu.vector_store %arg4[%c0_13, %c0_14, %c0_15], %30 {strides = array<i32>} : memref<1x8x128xf32, #tpu.memory_space<vmem>>, vector<1x8x128xf32>,
    } else {
    }
    return
  }
  func.func @transform_0(%arg0: i32, %arg1: i32) -> (i32, i32) {
    %c0_i32 = arith.constant 0 : i32
    %c0_i32_0 = arith.constant 0 : i32
    %c0_i32_1 = arith.constant 0 : i32
    return %c0_i32, %c0_i32_0 : i32, i32
  }
  func.func @transform_1(%arg0: i32, %arg1: i32) -> (i32, i32) {
    %c1_i32 = arith.constant 1 : i32
    %0 = arith.muli %arg0, %c1_i32 : i32
    %1 = arith.addi %0, %arg1 : i32
    %c0_i32 = arith.constant 0 : i32
    %c0_i32_0 = arith.constant 0 : i32
    return %1, %c0_i32 : i32, i32
  }
  func.func @transform_2(%arg0: i32, %arg1: i32) -> (i32, i32, i32) {
    %c0_i32 = arith.constant 0 : i32
    %c0_i32_0 = arith.constant 0 : i32
    %c0_i32_1 = arith.constant 0 : i32
    return %arg0, %c0_i32, %c0_i32_0 : i32, i32, i32
  }
}

</mosaic_0001>

<llo_original>
// kernel: tpu_custom_call.1
$region0: #{tpu_custom_call.1}
  #allocation0 [shape = 'u32[]', space=smem, size = 0x4, offset = 0x4, fixed_abs, tag = 'smem constant byte address 0x4 - core index']
  #allocation1 [shape = 'u32[144,128]{1,0:T(1,128)}', space=vmem, size = 0x12000, scoped, tag = 'internal scratch']
  #allocation2 [shape = 'f32[8,256]{1,0:T(8,128)}', space=vmem, size = 0x2000, scoped, tag = 'scratch operand']
  %s0 = inlined_call_operand.hbm [shape: f32[2,256], index: 0, kind: input, shape index: {}]
  %s1 = inlined_call_operand.hbm [shape: f32[8,256], index: 1, kind: input, shape index: {}]
  %s2 = inlined_call_operand.hbm [shape: f32[1,8,128], index: 2, kind: output, shape index: {}]
  %s3 = sld [smem:[#allocation0]]
  $region34: #{tpu_custom_call.1} parent=0
    _
  %s5 = ssub.s32 1, %s3
  %s6 = scalar_select 0, %s5, %s3
  $region1: #{tpu_custom_call.1} parent=0
    #allocation3 [shape = 'u8[2048]{0}', space=vmem, size = 0x800, scoped, tag = 'input window, operand 0, single buffered']
    #allocation4 [shape = 's32[1]{0}', space=sflag, size = 0x4, scoped, tag = 'scoped memory for tpu_custom_call.1']
    #allocation5 [shape = 's32[1]{0}', space=sflag, size = 0x4, scoped, tag = 'scoped memory for tpu_custom_call.1']
    #allocation6 [shape = 'u8[8192]{0}', space=vmem, size = 0x2000, scoped, tag = 'input window, operand 1, single buffered']
    #allocation7 [shape = 's32[1]{0}', space=sflag, size = 0x4, scoped, tag = 'scoped memory for tpu_custom_call.1']
    #allocation8 [shape = 'u8[4096]{0}', space=vmem, size = 0x1000, scoped, tag = 'output window, operand 0, single buffered']
    %7 = vsyncpa [#allocation4], 0
    %8 = vsyncpa [#allocation7], 0
    %9 = vsyncpa [#allocation5], 0
    // Predicated region
    $region2: #{tpu_custom_call.1} parent=1 // pred_check
      _
    $region3: #{tpu_custom_call.1} parent=1 // pred_check_branch
      %11 = sbr.rel (0) target = $region5
    $region4: #{tpu_custom_call.1} parent=1 // pred_region
      %s13 = ssub.s32 64, 64
      %14 = vsyncadd [#allocation4], %s13
      %s16 = sshll.u32 [#allocation3], 4
      %s17 = int_to_ptr.vmem [resolvable:$true] %s16
      %19 = dma.hbm_to_vmem [thread:$0]  %s0, 64, %s17, [#allocation4]
    $region5: #{tpu_custom_call.1} parent=1 // pred_fallthru
      _
    // Predicated region
    $region6: #{tpu_custom_call.1} parent=1 // pred_check
      _
    $region7: #{tpu_custom_call.1} parent=1 // pred_check_branch
      %21 = sbr.rel (0) target = $region9
    $region8: #{tpu_custom_call.1} parent=1 // pred_region
      %s22 = sadd.s32 0, 0
      %s24 = ssub.s32 256, 256
      %25 = vsyncadd [#allocation7], %s24
      %s26 = smul.addr %s22, 2
      %s27 = smul.addr %s26, 128
      %s28 = scalar_lea.hbm %s1, %s27
      %s30 = sshll.u32 [#allocation6], 4
      %s31 = int_to_ptr.vmem [resolvable:$true] %s30
      %33 = dma.hbm_to_vmem [thread:$0]  %s28, 256, %s31, [#allocation7]
    $region9: #{tpu_custom_call.1} parent=1 // pred_fallthru
      _
    // Predicated region
    $region10: #{tpu_custom_call.1} parent=1 // pred_check
      _
    $region11: #{tpu_custom_call.1} parent=1 // pred_check_branch
      %35 = sbr.rel (0) target = $region13
    $region12: #{tpu_custom_call.1} parent=1 // pred_region
      %36 = dma.done [#allocation4], 64
    $region13: #{tpu_custom_call.1} parent=1 // pred_fallthru
      _
    // Predicated region
    $region14: #{tpu_custom_call.1} parent=1 // pred_check
      _
    $region15: #{tpu_custom_call.1} parent=1 // pred_check_branch
      %38 = sbr.rel (0) target = $region17
    $region16: #{tpu_custom_call.1} parent=1 // pred_region
      %39 = dma.done [#allocation7], 256
    $region17: #{tpu_custom_call.1} parent=1 // pred_fallthru
      _
    %s40 = sadd.s32 0, 0
    %p41 = scmp.eq.s32.totalorder 0, 0
    // Predicated region
    $region18: #{tpu_custom_call.1} parent=1 // pred_check
      %p42 = pneg %p41
    $region19: #{tpu_custom_call.1} parent=1 // pred_check_branch
      %44 = sbr.rel (%p42) target = $region21
    $region20: #{tpu_custom_call.1} parent=1 // pred_region
      %45 = vst [vmem:[#allocation2] sm:$0xff] 0.0
      %46 = vst [vmem:[#allocation2 + $0x8] sm:$0xff] 0.0
    $region21: #{tpu_custom_call.1} parent=1 // pred_fallthru
      _
    %v47 = vld [vmem:[#allocation6] sm:$0xff]
    %v48 = vld [vmem:[#allocation6 + $0x8] sm:$0xff]
    %49 = vrot.lane.b32.xlu0 %v47, 127
    %v50 = vpop.permute.xlu0 %49
    %51 = vrot.lane.b32.xlu0 %v48, 127
    %v52 = vpop.permute.xlu0 %51
    %v53 = vlaneseq
    %v54 = vand.u32 %v53, 127
    %vm55 = vcmp.lt.s32.totalorder %v54, 127
    %v56 = vsel %vm55, %v50, %v52
    %v57 = vsel %vm55, %v52, %v50
    %58 = vrot.lane.b32.xlu0 %v47, 112
    %v59 = vpop.permute.xlu0 %58
    %60 = vrot.lane.b32.xlu0 %v48, 112
    %v61 = vpop.permute.xlu0 %60
    %vm62 = vcmp.lt.s32.totalorder %v54, 112
    %v63 = vsel %vm62, %v59, %v61
    %v64 = vsel %vm62, %v61, %v59
    %v65 = vsub.f32 %v56, %v47
    %v66 = vsub.f32 %v57, %v48
    %v67 = vsub.f32 %v63, %v47
    %v68 = vsub.f32 %v64, %v48
    %v69 = vld [vmem:[#allocation3] sm:$0xf]
    %v70 = vld [vmem:[#allocation2] sm:$0xff]
    %v71 = vld [vmem:[#allocation2 + $0x8] sm:$0xff]
    %v72 = vmul.f32 %v67, %v67
    %v73 = vmul.f32 %v68, %v68
    %v75 = vlaneseq
    %v76 = vshrl.u32 %v75, 7
    %v77 = vsub.s32 1, %v76
    %v78 = vrot.slane %v69, %v77
    %v79 = vlaneseq
    %v80 = vshrl.u32 %v79, 7
    %v81 = vsub.s32 3, %v80
    %v82 = vrot.slane %v69, %v81
    %v85 = vlaneseq
    %v86 = vshrl.u32 %v85, 7
    %v87 = vsub.s32 1, %v86
    %v88 = vrot.slane %v78, %v87
    %v89 = vlaneseq
    %v90 = vshrl.u32 %v89, 7
    %v91 = vsub.s32 1, %v90
    %v92 = vrot.slane %v82, %v91
    %v93 = vmul.f32 %v72, %v88
    %v94 = vmul.f32 %v73, %v92
    %v95 = vmul.f32 %v65, %v65
    %v96 = vmul.f32 %v66, %v66
    %v97 = vlaneseq
    %v98 = vshrl.u32 %v97, 7
    %v99 = vsub.s32 0, %v98
    %v100 = vrot.slane %v69, %v99
    %v101 = vlaneseq
    %v102 = vshrl.u32 %v101, 7
    %v103 = vsub.s32 2, %v102
    %v104 = vrot.slane %v69, %v103
    %v107 = vlaneseq
    %v108 = vshrl.u32 %v107, 7
    %v109 = vsub.s32 0, %v108
    %v110 = vrot.slane %v100, %v109
    %v111 = vlaneseq
    %v112 = vshrl.u32 %v111, 7
    %v113 = vsub.s32 0, %v112
    %v114 = vrot.slane %v104, %v113
    %v115 = vmul.f32 %v95, %v110
    %v116 = vmul.f32 %v96, %v114
    %v117 = vadd.f32 %v93, %v115
    %v118 = vadd.f32 %v94, %v116
    %v119 = vadd.f32 %v70, %v117
    %v120 = vadd.f32 %v71, %v118
    %121 = vst [vmem:[#allocation2] sm:$0xff] %v119
    %122 = vst [vmem:[#allocation2 + $0x8] sm:$0xff] %v120
    // Predicated region
    $region22: #{tpu_custom_call.1} parent=1 // pred_check
      %p123 = pneg %p41
    $region23: #{tpu_custom_call.1} parent=1 // pred_check_branch
      %125 = sbr.rel (%p123) target = $region25
    $region24: #{tpu_custom_call.1} parent=1 // pred_region
      %v126 = vld [vmem:[#allocation2] sm:$0xff]
      %v127 = vld [vmem:[#allocation2 + $0x8] sm:$0xff]
      %v128 = vadd.f32 %v126, %v127
      %129 = vadd.xlane.f32.xlu0 %v128
      %v130 = vpop.xlane.xlu0 %129
      %v131 = vrot.slane %v130, 4
      %v132 = vadd.f32 %v130, %v131
      %v133 = vrot.slane %v132, 2
      %v134 = vadd.f32 %v132, %v133
      %v135 = vrot.slane %v134, 1
      %v136 = vadd.f32 %v134, %v135
      %s137 = vtos %v136
      %s138 = smul.f32 %s137, 0.5
      %v139 = vstv %s138
      %140 = vst [vmem:[#allocation8] sm:$0xff] %v139
    $region25: #{tpu_custom_call.1} parent=1 // pred_fallthru
      _
    // Predicated region
    $region26: #{tpu_custom_call.1} parent=1 // pred_check
      _
    $region27: #{tpu_custom_call.1} parent=1 // pred_check_branch
      %142 = sbr.rel (0) target = $region29
    $region28: #{tpu_custom_call.1} parent=1 // pred_region
      %s144 = ssub.s32 128, 128
      %145 = vsyncadd [#allocation5], %s144
      %s147 = sshll.u32 [#allocation8], 4
      %s148 = int_to_ptr.vmem [resolvable:$true] %s147
      %150 = dma.vmem_to_hbm [thread:$0]  %s148, 128, %s2, [#allocation5]
    $region29: #{tpu_custom_call.1} parent=1 // pred_fallthru
      _
    // Predicated region
    $region30: #{tpu_custom_call.1} parent=1 // pred_check
      _
    $region31: #{tpu_custom_call.1} parent=1 // pred_check_branch
      %152 = sbr.rel (0) target = $region33
    $region32: #{tpu_custom_call.1} parent=1 // pred_region
      %153 = dma.done [#allocation5], 128
    $region33: #{tpu_custom_call.1} parent=1 // pred_fallthru
      _
    %154 = vsyncpa [#allocation4], 1
    %155 = vsyncpa [#allocation7], 1
    %156 = vsyncpa [#allocation5], 1

</llo_original>
